<compile_context>
chip_gen: v7x
topology: tpu7x:2x2x1
jax: 0.10.0
libtpu: 0.0.40
codegen_flags: <defaults>
</compile_context>

<pallas_src>
import functools

import jax
import jax.numpy as jnp
from jax.experimental import pallas as pl
from jax.experimental.pallas import tpu as pltpu


_NEG_BIG = -1e30  # finite "minus infinity" for masked (out-of-vocab) columns


def _round_up(x, m):
    return ((x + m - 1) // m) * m


def _vmem_capacity_bytes():
    """Physical VMEM per TensorCore; falls back to 128 MiB if unqueryable."""
    try:
        cap = int(getattr(pltpu.get_tpu_info(), "vmem_capacity_bytes", 0) or 0)
        if cap > 0:
            return cap
    except Exception:
        pass
    return 128 * 1024 * 1024


def _logits_lse_kernel(x_ref, w_ref, b_ref, logits_ref, lse_ref, m_ref, l_ref,
                       *, v_total, tile_vocab):
    """One (row tile, vocab tile): logits = x @ W + b, online LSE over vocab."""
    j = pl.program_id(1)

    @pl.when(j == 0)
    def _():
        m_ref[...] = jnp.full(m_ref.shape, -jnp.inf, jnp.float32)
        l_ref[...] = jnp.zeros(l_ref.shape, jnp.float32)

    # MXU matmul: compute-dtype operands, f32 accumulation.
    logits = jnp.dot(x_ref[...], w_ref[...], preferred_element_type=jnp.float32)
    logits = logits + b_ref[...]

    # Mask the ragged vocab tail (traced only when V % tile_vocab != 0) so the
    # garbage columns of the edge block never contaminate the row max / sum.
    if v_total % tile_vocab != 0:
        col = j * tile_vocab + jax.lax.broadcasted_iota(jnp.int32, logits.shape, 1)
        logits = jnp.where(col < v_total, logits, _NEG_BIG)

    # Online log-sum-exp update for this vocab tile.
    m_old = m_ref[...]
    m_new = jnp.maximum(m_old, jnp.max(logits, axis=-1, keepdims=True))
    l_ref[...] = l_ref[...] * jnp.exp(m_old - m_new) + jnp.sum(
        jnp.exp(logits - m_new), axis=-1, keepdims=True)
    m_ref[...] = m_new

    # Raw logits go straight to HBM; the fix-up kernel subtracts the LSE later.
    logits_ref[...] = logits.astype(logits_ref.dtype)

    @pl.when(j == pl.num_programs(1) - 1)
    def _():
        lse_ref[...] = m_ref[...] + jnp.log(l_ref[...])


def _normalize_kernel(logits_ref, lse_ref, o_ref):
    """Elementwise fix-up: log_probs = logits - lse (lane-dense, mem-bound)."""
    o_ref[...] = (logits_ref[...].astype(jnp.float32) - lse_ref[...]).astype(o_ref.dtype)


@functools.partial(
    jax.jit,
    static_argnames=("tile_rows", "tile_vocab", "compute_dtype", "out_dtype",
                     "logits_dtype"),
)
def linear_head(token_embeddings, weight, bias, *, tile_rows=512, tile_vocab=None,
                compute_dtype=jnp.bfloat16, out_dtype=None,
                logits_dtype=jnp.float32):
    """token_embeddings: (B, S, E); weight: (E, V) (= torch weight.T, ideally
    pre-cast once to `compute_dtype` by the caller); bias: (V,).
    Returns (B, S, V) log-probabilities (log_softmax(x @ W + b))."""
    B, S, E = token_embeddings.shape
    E_w, V = weight.shape
    assert E == E_w, "weight must be (embedding_size, vocabulary_size)"
    if out_dtype is None:
        out_dtype = token_embeddings.dtype

    rows = B * S
    comp_b = jnp.dtype(compute_dtype).itemsize
    logit_b = jnp.dtype(logits_dtype).itemsize
    out_b = jnp.dtype(out_dtype).itemsize

    # ---- generation-aware VMEM budget and default tiles ---------------------
    vmem_cap = _vmem_capacity_bytes()
    # ~48 MiB on 64 MiB parts (v7x), ~96 MiB on 128 MiB parts (v5e/v6e).
    vmem_limit = min(int(vmem_cap * 0.75), 100 * 1024 * 1024)
    if tile_vocab is None:
        tile_vocab = 1024 if vmem_cap <= 64 * 1024 * 1024 else 2048

    tm = _round_up(min(tile_rows, _round_up(rows, 8)), 8)     # rows per tile
    tv = _round_up(min(tile_vocab, _round_up(V, 128)), 128)   # vocab per tile

    def k1_vmem(tm_, tv_):
        # Double-buffered pipeline buffers for each in/out + f32 scratch.
        per_buf = (tm_ * E * comp_b        # x tile
                   + E * tv_ * comp_b      # W tile
                   + tv_ * 4               # bias tile
                   + tm_ * tv_ * logit_b   # logits tile
                   + tm_ * 4)              # lse tile
        return 2 * per_buf + 2 * tm_ * 4

    budget = int(vmem_limit * 0.8)  # headroom for compiler-internal temporaries
    while k1_vmem(tm, tv) > budget and tv > 128:
        tv = max(128, (tv // 2) // 128 * 128)
    while k1_vmem(tm, tv) > budget and tm > 8:
        tm = max(8, (tm // 2) // 8 * 8)

    n_i = pl.cdiv(rows, tm)
    n_j = pl.cdiv(V, tv)

    # ---- operands ------------------------------------------------------------
    x2d = token_embeddings.reshape(rows, E).astype(compute_dtype)
    if weight.dtype != compute_dtype:  # traced only if the caller did NOT pre-cast
        weight = weight.astype(compute_dtype)
    b2d = bias.astype(jnp.float32).reshape(1, V)

    # ---- kernel 1: logits + per-row log-sum-exp (W streamed exactly once) ----
    cost1 = pl.CostEstimate(
        flops=int(2 * (n_i * tm) * E * (n_j * tv)),
        transcendentals=int((n_i * tm) * (n_j * tv)),
        bytes_accessed=int(rows * E * comp_b
                           + n_i * E * (n_j * tv) * comp_b   # W once per row tile
                           + n_i * V * 4                     # bias
                           + rows * V * logit_b              # logits write
                           + rows * 4),                      # lse write
    )
    logits, lse = pl.pallas_call(
        functools.partial(_logits_lse_kernel, v_total=V, tile_vocab=tv),
        out_shape=(jax.ShapeDtypeStruct((rows, V), logits_dtype),
                   jax.ShapeDtypeStruct((rows, 1), jnp.float32)),
        grid_spec=pltpu.PrefetchScalarGridSpec(
            num_scalar_prefetch=0,
            grid=(n_i, n_j),                                   # vocab (reduction) last
            in_specs=[
                pl.BlockSpec((tm, E), lambda i, j: (i, 0)),    # x row tile (resident over j)
                pl.BlockSpec((E, tv), lambda i, j: (0, j)),    # W vocab tile (streamed)
                pl.BlockSpec((1, tv), lambda i, j: (0, j)),    # bias vocab tile
            ],
            out_specs=[
                pl.BlockSpec((tm, tv), lambda i, j: (i, j)),   # raw logits
                pl.BlockSpec((tm, 1), lambda i, j: (i, 0)),    # lse (written at last j)
            ],
            scratch_shapes=[pltpu.VMEM((tm, 1), jnp.float32),  # running max
                            pltpu.VMEM((tm, 1), jnp.float32)], # running sum-exp
        ),
        compiler_params=pltpu.CompilerParams(
            dimension_semantics=("parallel", "arbitrary"),
            vmem_limit_bytes=vmem_limit,
        ),
        cost_estimate=cost1,
    )(x2d, weight, b2d)

    # ---- kernel 2: elementwise fix-up (logits - lse), pure mem-bound ---------
    tm2 = _round_up(min(512, _round_up(rows, 8)), 8)
    tv2 = _round_up(min(2048, _round_up(V, 128)), 128)
    while 2 * (tm2 * tv2 * (logit_b + out_b) + tm2 * 4) > budget and tv2 > 128:
        tv2 = max(128, (tv2 // 2) // 128 * 128)
    n_i2 = pl.cdiv(rows, tm2)
    n_j2 = pl.cdiv(V, tv2)

    cost2 = pl.CostEstimate(
        flops=int(rows * V),
        transcendentals=0,
        bytes_accessed=int(rows * V * (logit_b + out_b) + rows * 4),
    )
    out2d = pl.pallas_call(
        _normalize_kernel,
        out_shape=jax.ShapeDtypeStruct((rows, V), out_dtype),
        grid_spec=pltpu.PrefetchScalarGridSpec(
            num_scalar_prefetch=0,
            grid=(n_i2, n_j2),
            in_specs=[
                pl.BlockSpec((tm2, tv2), lambda i, j: (i, j)),
                pl.BlockSpec((tm2, 1), lambda i, j: (i, 0)),
            ],
            out_specs=pl.BlockSpec((tm2, tv2), lambda i, j: (i, j)),
        ),
        compiler_params=pltpu.CompilerParams(
            dimension_semantics=("parallel", "parallel"),
            vmem_limit_bytes=vmem_limit,
        ),
        cost_estimate=cost2,
    )(logits, lse)

    return out2d.reshape(B, S, V)


if __name__ == "__main__":
    # Small, deterministic shapes consistent with the module.  vocab=200 is
    # deliberately NOT a multiple of 128 so the ragged-tail mask is exercised.
    batch, seq, embedding_size, vocabulary_size = 2, 8, 32, 200

    key = jax.random.PRNGKey(0)
    kx, kw, kb = jax.random.split(key, 3)

    # Deterministic init (mimics nn.Linear's uniform(-1/sqrt(E), 1/sqrt(E))).
    bound = 1.0 / (embedding_size ** 0.5)
    weight = jax.random.uniform(
        kw, (embedding_size, vocabulary_size), jnp.float32, -bound, bound)
    bias = jax.random.uniform(kb, (vocabulary_size,), jnp.float32, -bound, bound)
    x = jax.random.normal(kx, (batch, seq, embedding_size), jnp.float32)

    # Pre-cast the weight ONCE outside the jitted call (no per-call HBM cast).
    weight_bf16 = jax.block_until_ready(weight.astype(jnp.bfloat16))

    # Small explicit tiles so this tiny demo still exercises multiple row tiles,
    # multiple vocab tiles, the ragged-vocab mask and the online-LSE carry.
    out = linear_head(x, weight_bf16, bias, tile_rows=8, tile_vocab=128)
    out = jax.block_until_ready(out)

    # Reference with the same bf16 operand rounding (kernel accumulates in f32).
    x_c = x.astype(jnp.bfloat16).astype(jnp.float32)
    w_c = weight.astype(jnp.bfloat16).astype(jnp.float32)
    ref = jax.nn.log_softmax(x_c @ w_c + bias, axis=-1)

    assert out.shape == (batch, seq, vocabulary_size)
    assert bool(jnp.all(jnp.isfinite(out)))
    assert jnp.allclose(out.astype(jnp.float32), ref, atol=5e-3, rtol=5e-3)

    print("KERNEL_OK")
</pallas_src>

<mosaic_0001>
module attributes {stable_mosaic.version = 11 : i64} {
  func.func @_normalize_kernel(%arg0: i32, %arg1: i32, %arg2: memref<16x256xf32, #tpu.memory_space<vmem>>, %arg3: memref<16x1xf32, #tpu.memory_space<vmem>>, %arg4: memref<16x256xf32, #tpu.memory_space<vmem>>) attributes {dimension_semantics = [#tpu.dimension_semantics<parallel>, #tpu.dimension_semantics<parallel>], iteration_bounds = array<i64: 1, 1>, scalar_prefetch = 0 : i64, scratch_operands = 0 : i64, tpu.core_type = #tpu.core_type<tc>, window_params = [{transform_indices = @transform_0, window_bounds = array<i64: 16, 256>}, {transform_indices = @transform_1, window_bounds = array<i64: 16, 1>}, {transform_indices = @transform_2, window_bounds = array<i64: 16, 256>}]} {
    %c0 = arith.constant 0 : index
    %c0_0 = arith.constant 0 : index
    %0 = vector.load %arg2[%c0, %c0_0] : memref<16x256xf32, #tpu.memory_space<vmem>>, vector<16x256xf32>
    %c0_1 = arith.constant 0 : index
    %c0_2 = arith.constant 0 : index
    %1 = vector.load %arg3[%c0_1, %c0_2] : memref<16x1xf32, #tpu.memory_space<vmem>>, vector<16x1xf32>
    %2 = vector.broadcast %1 : vector<16x1xf32> to vector<16x256xf32>
    %3 = arith.subf %0, %2 : vector<16x256xf32>
    %c0_3 = arith.constant 0 : index
    %c0_4 = arith.constant 0 : index
    %4 = vector.load %arg4[%c0_3, %c0_4] : memref<16x256xf32, #tpu.memory_space<vmem>>, vector<16x256xf32>
    tpu.vector_store %arg4[%c0_3, %c0_4], %3 {strides = array<i32>} : memref<16x256xf32, #tpu.memory_space<vmem>>, vector<16x256xf32>,
    return
  }
  func.func @transform_0(%arg0: i32, %arg1: i32) -> (i32, i32) {
    %c0_i32 = arith.constant 0 : i32
    return %arg0, %arg1 : i32, i32
  }
  func.func @transform_1(%arg0: i32, %arg1: i32) -> (i32, i32) {
    %c0_i32 = arith.constant 0 : i32
    %c0_i32_0 = arith.constant 0 : i32
    return %arg0, %c0_i32 : i32, i32
  }
  func.func @transform_2(%arg0: i32, %arg1: i32) -> (i32, i32) {
    %c0_i32 = arith.constant 0 : i32
    return %arg0, %arg1 : i32, i32
  }
}

module attributes {stable_mosaic.version = 11 : i64} {
  func.func @_logits_lse_kernel(%arg0: i32, %arg1: i32, %arg2: memref<8x32xbf16, #tpu.memory_space<vmem>>, %arg3: memref<32x128xbf16, #tpu.memory_space<vmem>>, %arg4: memref<1x128xf32, #tpu.memory_space<vmem>>, %arg5: memref<8x128xf32, #tpu.memory_space<vmem>>, %arg6: memref<8x1xf32, #tpu.memory_space<vmem>>, %arg7: memref<8x1xf32, #tpu.memory_space<vmem>>, %arg8: memref<8x1xf32, #tpu.memory_space<vmem>>) attributes {dimension_semantics = [#tpu.dimension_semantics<parallel>, #tpu.dimension_semantics<arbitrary>], iteration_bounds = array<i64: 2, 2>, scalar_prefetch = 0 : i64, scratch_operands = 2 : i64, tpu.core_type = #tpu.core_type<tc>, window_params = [{transform_indices = @transform_0, window_bounds = array<i64: 8, 32>}, {transform_indices = @transform_1, window_bounds = array<i64: 32, 128>}, {transform_indices = @transform_2, window_bounds = array<i64: 1, 128>}, {transform_indices = @transform_3, window_bounds = array<i64: 8, 128>}, {transform_indices = @transform_4, window_bounds = array<i64: 8, 1>}]} {
    %c0_i32 = arith.constant 0 : i32
    %0 = arith.cmpi eq, %arg1, %c0_i32 : i32
    %1 = arith.extui %0 : i1 to i32
    %c0_i32_0 = arith.constant 0 : i32
    %2 = arith.cmpi ne, %1, %c0_i32_0 : i32
    scf.if %2 {
      %cst_20 = arith.constant 0xFF800000 : f32
      %37 = vector.broadcast %cst_20 : f32 to vector<8x1xf32>
      %c0_21 = arith.constant 0 : index
      %c0_22 = arith.constant 0 : index
      %38 = vector.load %arg7[%c0_21, %c0_22] : memref<8x1xf32, #tpu.memory_space<vmem>>, vector<8x1xf32>
      tpu.vector_store %arg7[%c0_21, %c0_22], %37 {strides = array<i32>} : memref<8x1xf32, #tpu.memory_space<vmem>>, vector<8x1xf32>,
      %cst_23 = arith.constant 0.000000e+00 : f32
      %39 = vector.broadcast %cst_23 : f32 to vector<8x1xf32>
      %c0_24 = arith.constant 0 : index
      %c0_25 = arith.constant 0 : index
      %40 = vector.load %arg8[%c0_24, %c0_25] : memref<8x1xf32, #tpu.memory_space<vmem>>, vector<8x1xf32>
      tpu.vector_store %arg8[%c0_24, %c0_25], %39 {strides = array<i32>} : memref<8x1xf32, #tpu.memory_space<vmem>>, vector<8x1xf32>,
    } else {
    }
    %c0 = arith.constant 0 : index
    %c0_1 = arith.constant 0 : index
    %3 = vector.load %arg2[%c0, %c0_1] : memref<8x32xbf16, #tpu.memory_space<vmem>>, vector<8x32xbf16>
    %c0_2 = arith.constant 0 : index
    %c0_3 = arith.constant 0 : index
    %4 = vector.load %arg3[%c0_2, %c0_3] : memref<32x128xbf16, #tpu.memory_space<vmem>>, vector<32x128xbf16>
    %cst = arith.constant dense<0.000000e+00> : vector<8x128xf32>
    %5 = tpu.matmul %3, %4, %cst {dimension_numbers = #tpu.dot_dimension_numbers<[1], [0], [0], [1], [0, 0, 1, 1], [], []>} : vector<8x32xbf16>, vector<32x128xbf16>, vector<8x128xf32> -> vector<8x128xf32>
    %c0_4 = arith.constant 0 : index
    %c0_5 = arith.constant 0 : index
    %6 = vector.load %arg4[%c0_4, %c0_5] : memref<1x128xf32, #tpu.memory_space<vmem>>, vector<1x128xf32>
    %7 = vector.broadcast %6 : vector<1x128xf32> to vector<8x128xf32>
    %8 = arith.addf %5, %7 : vector<8x128xf32>
    %c128_i32 = arith.constant 128 : i32
    %9 = arith.muli %arg1, %c128_i32 : i32
    %10 = tpu.iota {dimensions = array<i32: 1>} : vector<8x128xi32>
    %11 = vector.broadcast %9 : i32 to vector<8x128xi32>
    %12 = arith.addi %11, %10 : vector<8x128xi32>
    %c200_i32 = arith.constant 200 : i32
    %13 = vector.broadcast %c200_i32 : i32 to vector<8x128xi32>
    %14 = arith.cmpi slt, %12, %13 : vector<8x128xi32>
    %cst_6 = arith.constant -1.000000e+30 : f32
    %15 = vector.broadcast %cst_6 : f32 to vector<8x128xf32>
    %16 = arith.select %14, %8, %15 : vector<8x128xi1>, vector<8x128xf32>
    %c0_7 = arith.constant 0 : index
    %c0_8 = arith.constant 0 : index
    %17 = vector.load %arg7[%c0_7, %c0_8] : memref<8x1xf32, #tpu.memory_space<vmem>>, vector<8x1xf32>
    %cst_9 = arith.constant dense<0xFF800000> : vector<8xf32>
    %18 = vector.multi_reduction <maximumf>, %16, %cst_9 [1] : vector<8x128xf32> to vector<8xf32>
    %19 = vector.shape_cast %18 : vector<8xf32> to vector<8x1xf32>
    %20 = arith.maximumf %17, %19 : vector<8x1xf32>
    %c0_10 = arith.constant 0 : index
    %c0_11 = arith.constant 0 : index
    %21 = vector.load %arg8[%c0_10, %c0_11] : memref<8x1xf32, #tpu.memory_space<vmem>>, vector<8x1xf32>
    %22 = arith.subf %17, %20 : vector<8x1xf32>
    %23 = math.exp %22 : vector<8x1xf32>
    %24 = arith.mulf %21, %23 : vector<8x1xf32>
    %25 = vector.broadcast %20 : vector<8x1xf32> to vector<8x128xf32>
    %26 = arith.subf %16, %25 : vector<8x128xf32>
    %27 = math.exp %26 : vector<8x128xf32>
    %cst_12 = arith.constant dense<0.000000e+00> : vector<8xf32>
    %28 = vector.multi_reduction <add>, %27, %cst_12 [1] : vector<8x128xf32> to vector<8xf32>
    %29 = vector.shape_cast %28 : vector<8xf32> to vector<8x1xf32>
    %30 = arith.addf %24, %29 : vector<8x1xf32>
    %c0_13 = arith.constant 0 : index
    %c0_14 = arith.constant 0 : index
    %31 = vector.load %arg8[%c0_13, %c0_14] : memref<8x1xf32, #tpu.memory_space<vmem>>, vector<8x1xf32>
    tpu.vector_store %arg8[%c0_13, %c0_14], %30 {strides = array<i32>} : memref<8x1xf32, #tpu.memory_space<vmem>>, vector<8x1xf32>,
    %c0_15 = arith.constant 0 : index
    %c0_16 = arith.constant 0 : index
    %32 = vector.load %arg7[%c0_15, %c0_16] : memref<8x1xf32, #tpu.memory_space<vmem>>, vector<8x1xf32>
    tpu.vector_store %arg7[%c0_15, %c0_16], %20 {strides = array<i32>} : memref<8x1xf32, #tpu.memory_space<vmem>>, vector<8x1xf32>,
    %c0_17 = arith.constant 0 : index
    %c0_18 = arith.constant 0 : index
    %33 = vector.load %arg5[%c0_17, %c0_18] : memref<8x128xf32, #tpu.memory_space<vmem>>, vector<8x128xf32>
    tpu.vector_store %arg5[%c0_17, %c0_18], %16 {strides = array<i32>} : memref<8x128xf32, #tpu.memory_space<vmem>>, vector<8x128xf32>,
    %c1_i32 = arith.constant 1 : i32
    %34 = arith.cmpi eq, %arg1, %c1_i32 : i32
    %35 = arith.extui %34 : i1 to i32
    %c0_i32_19 = arith.constant 0 : i32
    %36 = arith.cmpi ne, %35, %c0_i32_19 : i32
    scf.if %36 {
      %c0_20 = arith.constant 0 : index
      %c0_21 = arith.constant 0 : index
      %37 = vector.load %arg7[%c0_20, %c0_21] : memref<8x1xf32, #tpu.memory_space<vmem>>, vector<8x1xf32>
      %c0_22 = arith.constant 0 : index
      %c0_23 = arith.constant 0 : index
      %38 = vector.load %arg8[%c0_22, %c0_23] : memref<8x1xf32, #tpu.memory_space<vmem>>, vector<8x1xf32>
      %39 = math.log %38 : vector<8x1xf32>
      %40 = arith.addf %37, %39 : vector<8x1xf32>
      %c0_24 = arith.constant 0 : index
      %c0_25 = arith.constant 0 : index
      %41 = vector.load %arg6[%c0_24, %c0_25] : memref<8x1xf32, #tpu.memory_space<vmem>>, vector<8x1xf32>
      tpu.vector_store %arg6[%c0_24, %c0_25], %40 {strides = array<i32>} : memref<8x1xf32, #tpu.memory_space<vmem>>, vector<8x1xf32>,
    } else {
    }
    return
  }
  func.func @transform_0(%arg0: i32, %arg1: i32) -> (i32, i32) {
    %c0_i32 = arith.constant 0 : i32
    %c0_i32_0 = arith.constant 0 : i32
    return %arg0, %c0_i32 : i32, i32
  }
  func.func @transform_1(%arg0: i32, %arg1: i32) -> (i32, i32) {
    %c0_i32 = arith.constant 0 : i32
    %c0_i32_0 = arith.constant 0 : i32
    return %c0_i32, %arg1 : i32, i32
  }
  func.func @transform_2(%arg0: i32, %arg1: i32) -> (i32, i32) {
    %c0_i32 = arith.constant 0 : i32
    %c0_i32_0 = arith.constant 0 : i32
    return %c0_i32, %arg1 : i32, i32
  }
  func.func @transform_3(%arg0: i32, %arg1: i32) -> (i32, i32) {
    %c0_i32 = arith.constant 0 : i32
    return %arg0, %arg1 : i32, i32
  }
  func.func @transform_4(%arg0: i32, %arg1: i32) -> (i32, i32) {
    %c0_i32 = arith.constant 0 : i32
    %c0_i32_0 = arith.constant 0 : i32
    return %arg0, %c0_i32 : i32, i32
  }
}

</mosaic_0001>

<llo_original>
// kernel: linear_head.3
$region0: #{linear_head.3}
  #allocation0 [shape = 'u32[]', space=smem, size = 0x4, offset = 0x4, fixed_abs, tag = 'smem constant byte address 0x4 - core index']
  #allocation1 [shape = 'u32[144,128]{1,0:T(1,128)}', space=vmem, size = 0x12000, scoped, tag = 'internal scratch']
  %s0 = inlined_call_operand.hbm [shape: f32[16,200], index: 0, kind: input, shape index: {}]
  %s1 = inlined_call_operand.hbm [shape: f32[16,1], index: 1, kind: input, shape index: {}]
  %s2 = inlined_call_operand.hbm [shape: f32[16,200], index: 2, kind: output, shape index: {}]
  %s3 = sld [smem:[#allocation0]]
  $region26: #{linear_head.3} parent=0
    _
  %s5 = ssub.s32 1, %s3
  %s6 = scalar_select 0, %s5, %s3
  $region1: #{linear_head.3} parent=0
    #allocation2 [shape = 'u8[16384]{0}', space=vmem, size = 0x4000, scoped, tag = 'input window, operand 0, single buffered']
    #allocation3 [shape = 's32[1]{0}', space=sflag, size = 0x4, scoped, tag = 'scoped memory for linear_head.3']
    #allocation4 [shape = 's32[1]{0}', space=sflag, size = 0x4, scoped, tag = 'scoped memory for linear_head.3']
    #allocation5 [shape = 'u8[8192]{0}', space=vmem, size = 0x2000, scoped, tag = 'input window, operand 1, single buffered']
    #allocation6 [shape = 's32[1]{0}', space=sflag, size = 0x4, scoped, tag = 'scoped memory for linear_head.3']
    #allocation7 [shape = 'u8[16384]{0}', space=vmem, size = 0x4000, scoped, tag = 'output window, operand 0, single buffered']
    %7 = vsyncpa [#allocation3], 0
    %8 = vsyncpa [#allocation6], 0
    %9 = vsyncpa [#allocation4], 0
    // Predicated region
    $region2: #{linear_head.3} parent=1 // pred_check
      _
    $region3: #{linear_head.3} parent=1 // pred_check_branch
      %11 = sbr.rel (0) target = $region5
    $region4: #{linear_head.3} parent=1 // pred_region
      %s13 = ssub.s32 512, 512
      %14 = vsyncadd [#allocation3], %s13
      %s15 = sshll.u32 [#allocation2], 4
      %s16 = int_to_ptr.vmem [resolvable:$true] %s15
      %21 = dma.hbm_to_vmem [thread:$0]  %s0, 512, %s16, [#allocation3], 256, 256, 16
    $region5: #{linear_head.3} parent=1 // pred_fallthru
      _
    // Predicated region
    $region6: #{linear_head.3} parent=1 // pred_check
      _
    $region7: #{linear_head.3} parent=1 // pred_check_branch
      %23 = sbr.rel (0) target = $region9
    $region8: #{linear_head.3} parent=1 // pred_region
      %s25 = ssub.s32 256, 256
      %26 = vsyncadd [#allocation6], %s25
      %s27 = sshll.u32 [#allocation5], 4
      %s28 = int_to_ptr.vmem [resolvable:$true] %s27
      %33 = dma.hbm_to_vmem [thread:$0]  %s1, 256, %s28, [#allocation6], 128, 128, 8
    $region9: #{linear_head.3} parent=1 // pred_fallthru
      _
    // Predicated region
    $region10: #{linear_head.3} parent=1 // pred_check
      _
    $region11: #{linear_head.3} parent=1 // pred_check_branch
      %35 = sbr.rel (0) target = $region13
    $region12: #{linear_head.3} parent=1 // pred_region
      %36 = dma.done [#allocation3], 512
    $region13: #{linear_head.3} parent=1 // pred_fallthru
      _
    // Predicated region
    $region14: #{linear_head.3} parent=1 // pred_check
      _
    $region15: #{linear_head.3} parent=1 // pred_check_branch
      %38 = sbr.rel (0) target = $region17
    $region16: #{linear_head.3} parent=1 // pred_region
      %39 = dma.done [#allocation6], 256
    $region17: #{linear_head.3} parent=1 // pred_fallthru
      _
    %v40 = vld [vmem:[#allocation2] sm:$0xff]
    %v41 = vld [vmem:[#allocation2 + $0x8] sm:$0xff]
    %v42 = vld [vmem:[#allocation2 + $0x10] sm:$0xff]
    %v43 = vld [vmem:[#allocation2 + $0x18] sm:$0xff]
    %v44 = vld [vmem:[#allocation5] sm:$0xff]
    %v45 = vld [vmem:[#allocation5 + $0x8] sm:$0xff]
    %47 = vset.pattern.permute.xlu0 0
    %48 = vperm.xlu0 %47, %v44
    %v49 = vpop.permute.xlu0 %48
    %52 = vset.pattern.permute.xlu0 0
    %53 = vperm.xlu0 %52, %v45
    %v54 = vpop.permute.xlu0 %53
    %v56 = vsub.f32 %v40, %v49
    %v57 = vsub.f32 %v41, %v49
    %v58 = vsub.f32 %v42, %v54
    %v59 = vsub.f32 %v43, %v54
    %60 = vst [vmem:[#allocation7] sm:$0xff] %v56
    %61 = vst [vmem:[#allocation7 + $0x8] sm:$0xff] %v57
    %62 = vst [vmem:[#allocation7 + $0x10] sm:$0xff] %v58
    %63 = vst [vmem:[#allocation7 + $0x18] sm:$0xff] %v59
    // Predicated region
    $region18: #{linear_head.3} parent=1 // pred_check
      _
    $region19: #{linear_head.3} parent=1 // pred_check_branch
      %65 = sbr.rel (0) target = $region21
    $region20: #{linear_head.3} parent=1 // pred_region
      %s67 = ssub.s32 512, 512
      %68 = vsyncadd [#allocation4], %s67
      %s69 = sshll.u32 [#allocation7], 4
      %s70 = int_to_ptr.vmem [resolvable:$true] %s69
      %75 = dma.vmem_to_hbm [thread:$0]  %s70, 512, %s2, [#allocation4], 256, 256, 16
    $region21: #{linear_head.3} parent=1 // pred_fallthru
      _
    // Predicated region
    $region22: #{linear_head.3} parent=1 // pred_check
      _
    $region23: #{linear_head.3} parent=1 // pred_check_branch
      %77 = sbr.rel (0) target = $region25
    $region24: #{linear_head.3} parent=1 // pred_region
      %78 = dma.done [#allocation4], 512
    $region25: #{linear_head.3} parent=1 // pred_fallthru
      _
    %79 = vsyncpa [#allocation3], 1
    %80 = vsyncpa [#allocation6], 1
    %81 = vsyncpa [#allocation4], 1

// kernel: linear_head.2
$region0: #{linear_head.2}
  #allocation0 [shape = 'u32[]', space=smem, size = 0x4, offset = 0x4, fixed_abs, tag = 'smem constant byte address 0x4 - core index']
  #allocation1 [shape = 'u32[144,128]{1,0:T(1,128)}', space=vmem, size = 0x12000, scoped, tag = 'internal scratch']
  #allocation2 [shape = 'f32[8,1]{1,0:T(8,128)}', space=vmem, size = 0x1000, scoped, tag = 'scratch operand']
  #allocation3 [shape = 'f32[8,1]{1,0:T(8,128)}', space=vmem, size = 0x1000, scoped, tag = 'scratch operand']
  %s0 = inlined_call_operand.hbm [shape: bf16[16,32], index: 0, kind: input, shape index: {}]
  %s1 = inlined_call_operand.hbm [shape: bf16[32,200], index: 1, kind: input, shape index: {}]
  %s2 = inlined_call_operand.hbm [shape: f32[1,200], index: 2, kind: input, shape index: {}]
  %s3 = inlined_call_operand.hbm [shape: f32[16,200], index: 3, kind: output, shape index: {0}]
  %s4 = inlined_call_operand.hbm [shape: f32[16,1], index: 4, kind: output, shape index: {1}]
  %5 = xla_tuple %s3, %s4
  %s6 = sld [smem:[#allocation0]]
  $region73: #{linear_head.2} parent=0
    _
  %s8 = ssub.s32 1, %s6
  %s9 = scalar_select 0, %s8, %s6
  $region1: #{linear_head.2} parent=0
    #allocation4 [shape = 'u8[4096]{0}', space=vmem, size = 0x1000, scoped, tag = 'input window, operand 0']
    #allocation5 [shape = 's32[2]{0}', space=sflag, size = 0x8, scoped, tag = 'scoped memory for linear_head.2']
    #allocation6 [shape = 's32[2]{0}', space=sflag, size = 0x8, scoped, tag = 'scoped memory for linear_head.2']
    #allocation7 [shape = 'u8[16384]{0}', space=vmem, size = 0x4000, scoped, tag = 'input window, operand 1']
    #allocation8 [shape = 's32[2]{0}', space=sflag, size = 0x8, scoped, tag = 'scoped memory for linear_head.2']
    #allocation9 [shape = 'u8[1024]{0}', space=vmem, size = 0x400, scoped, tag = 'input window, operand 2']
    #allocation10 [shape = 'u8[8192]{0}', space=vmem, size = 0x2000, scoped, tag = 'output window, operand 0']
    #allocation11 [shape = 'u8[8192]{0}', space=vmem, size = 0x2000, scoped, tag = 'output window, operand 1']
    #allocation12 [shape = 's32[2]{0}', space=sflag, size = 0x8, scoped, tag = 'scoped memory for linear_head.2']
    %10 = vsyncpa [#allocation5], 0
    %s11 = scalar_lea.sflag [#allocation5], 1
    %12 = vsyncpa %s11, 0
    %13 = vsyncpa [#allocation8], 0
    %s14 = scalar_lea.sflag [#allocation8], 1
    %15 = vsyncpa %s14, 0
    %16 = vsyncpa [#allocation6], 0
    %s17 = scalar_lea.sflag [#allocation6], 1
    %18 = vsyncpa %s17, 0
    %19 = vsyncpa [#allocation12], 0
    %s20 = scalar_lea.sflag [#allocation12], 1
    %21 = vsyncpa %s20, 0
    loop: start=0, step=1, limit=6
    $region2: #{linear_head.2} parent=1 // loop_pre_header
      _
    $region3: #{linear_head.2} parent=1 // loop_header
      %s23 = sphi 0, %s27
      %p24 = scmp.ge.s32.totalorder %s23, 6
      %s30 = sphi 0, %s42
      %s31 = sphi 0, %s38
      %s32 = sphi 0, %s30
      %s33 = sphi 0, %s31
      %s34 = sphi 0, %s32
      %s35 = sphi 0, %s33
      %s45 = sphi 0, %s47
      %s48 = sphi 0, %s45
      %s49 = sphi 0, %s48
      %s65 = sphi 0, %s49
      %s71 = sphi 0, %s73
      %s74 = sphi 0, %s71
      %s75 = sphi 0, %s74
      %s91 = sphi 0, %s75
      %s97 = sphi 0, %s99
      %s100 = sphi 0, %s97
      %s101 = sphi 0, %s100
      %s117 = sphi 0, %s101
      %s125 = sphi 0, %s127
      %s128 = sphi 0, %s125
      %s129 = sphi 0, %s128
      %s145 = sphi 0, %s129
      %s151 = sphi 0, %s153
      %s154 = sphi 0, %s151
      %s155 = sphi 0, %s154
      %s171 = sphi 0, %s155
    $region4: #{linear_head.2} parent=1 // loop_header_branch
      %26 = sbr.rel (%p24) target = $region8
    $region5: #{linear_head.2} parent=1 // loop_body
      %s28 = ssub.s32 %s23, 1
      %s29 = ssub.s32 %s23, 2
      %s36 = sadd.s32 1, %s31
      %p37 = scmp.ge.s32.totalorder %s36, 2
      %s38 = scalar_select %p37, 0, %s36
      %s39 = sadd.s32 1, %s30
      %s40 = scalar_select %p37, %s39, %s30
      %p41 = scmp.ge.s32.totalorder %s40, 2
      %s42 = scalar_select %p41, 0, %s40
      %s43 = ssub.s32 %s30, %s42
      %p44 = scmp.eq.s32.totalorder %s43, 0
      %s46 = sadd.s32 %s45, 1
      %s47 = scalar_select %p44, %s45, %s46
      %p50 = pneg %p44
      %p51 = scmp.eq.s32.totalorder %s23, 3
      %p52 = por %p50, %p51
      %p53 = scmp.ne.s32.totalorder %s45, %s48
      %p54 = scmp.eq.s32.totalorder %s23, 0
      %p55 = por %p53, %p54
      %p56 = scmp.ne.s32.totalorder %s45, %s48
      %p57 = scmp.eq.s32.totalorder %s28, 3
      %p58 = por %p56, %p57
      %p59 = scmp.ne.s32.totalorder %s48, %s49
      %p60 = scmp.eq.s32.totalorder %s28, 0
      %p61 = por %p59, %p60
      %p62 = scmp.ne.s32.totalorder %s48, %s49
      %p63 = scmp.eq.s32.totalorder %s29, 3
      %p64 = por %p62, %p63
      %p66 = scmp.ne.s32.totalorder %s49, %s65
      %p67 = scmp.eq.s32.totalorder %s29, 0
      %p68 = por %p66, %p67
      %s69 = ssub.s32 %s31, %s38
      %p70 = scmp.eq.s32.totalorder %s69, 0
      %s72 = sadd.s32 %s71, 1
      %s73 = scalar_select %p70, %s71, %s72
      %p76 = pneg %p70
      %p77 = scmp.eq.s32.totalorder %s23, 3
      %p78 = por %p76, %p77
      %p79 = scmp.ne.s32.totalorder %s71, %s74
      %p80 = scmp.eq.s32.totalorder %s23, 0
      %p81 = por %p79, %p80
      %p82 = scmp.ne.s32.totalorder %s71, %s74
      %p83 = scmp.eq.s32.totalorder %s28, 3
      %p84 = por %p82, %p83
      %p85 = scmp.ne.s32.totalorder %s74, %s75
      %p86 = scmp.eq.s32.totalorder %s28, 0
      %p87 = por %p85, %p86
      %p88 = scmp.ne.s32.totalorder %s74, %s75
      %p89 = scmp.eq.s32.totalorder %s29, 3
      %p90 = por %p88, %p89
      %p92 = scmp.ne.s32.totalorder %s75, %s91
      %p93 = scmp.eq.s32.totalorder %s29, 0
      %p94 = por %p92, %p93
      %s95 = ssub.s32 %s31, %s38
      %p96 = scmp.eq.s32.totalorder %s95, 0
      %s98 = sadd.s32 %s97, 1
      %s99 = scalar_select %p96, %s97, %s98
      %p102 = pneg %p96
      %p103 = scmp.eq.s32.totalorder %s23, 3
      %p104 = por %p102, %p103
      %p105 = scmp.ne.s32.totalorder %s97, %s100
      %p106 = scmp.eq.s32.totalorder %s23, 0
      %p107 = por %p105, %p106
      %p108 = scmp.ne.s32.totalorder %s97, %s100
      %p109 = scmp.eq.s32.totalorder %s28, 3
      %p110 = por %p108, %p109
      %p111 = scmp.ne.s32.totalorder %s100, %s101
      %p112 = scmp.eq.s32.totalorder %s28, 0
      %p113 = por %p111, %p112
      %p114 = scmp.ne.s32.totalorder %s100, %s101
      %p115 = scmp.eq.s32.totalorder %s29, 3
      %p116 = por %p114, %p115
      %p118 = scmp.ne.s32.totalorder %s101, %s117
      %p119 = scmp.eq.s32.totalorder %s29, 0
      %p120 = por %p118, %p119
      %s121 = ssub.s32 %s30, %s42
      %s122 = ssub.s32 %s31, %s38
      %s123 = sor.u32 %s121, %s122
      %p124 = scmp.eq.s32.totalorder %s123, 0
      %s126 = sadd.s32 %s125, 1
      %s127 = scalar_select %p124, %s125, %s126
      %p130 = pneg %p124
      %p131 = scmp.eq.s32.totalorder %s23, 3
      %p132 = por %p130, %p131
      %p133 = scmp.ne.s32.totalorder %s125, %s128
      %p134 = scmp.eq.s32.totalorder %s23, 0
      %p135 = por %p133, %p134
      %p136 = scmp.ne.s32.totalorder %s125, %s128
      %p137 = scmp.eq.s32.totalorder %s28, 3
      %p138 = por %p136, %p137
      %p139 = scmp.ne.s32.totalorder %s128, %s129
      %p140 = scmp.eq.s32.totalorder %s28, 0
      %p141 = por %p139, %p140
      %p142 = scmp.ne.s32.totalorder %s128, %s129
      %p143 = scmp.eq.s32.totalorder %s29, 3
      %p144 = por %p142, %p143
      %p146 = scmp.ne.s32.totalorder %s129, %s145
      %p147 = scmp.eq.s32.totalorder %s29, 0
      %p148 = por %p146, %p147
      %s149 = ssub.s32 %s30, %s42
      %p150 = scmp.eq.s32.totalorder %s149, 0
      %s152 = sadd.s32 %s151, 1
      %s153 = scalar_select %p150, %s151, %s152
      %p156 = pneg %p150
      %p157 = scmp.eq.s32.totalorder %s23, 3
      %p158 = por %p156, %p157
      %p159 = scmp.ne.s32.totalorder %s151, %s154
      %p160 = scmp.eq.s32.totalorder %s23, 0
      %p161 = por %p159, %p160
      %p162 = scmp.ne.s32.totalorder %s151, %s154
      %p163 = scmp.eq.s32.totalorder %s28, 3
      %p164 = por %p162, %p163
      %p165 = scmp.ne.s32.totalorder %s154, %s155
      %p166 = scmp.eq.s32.totalorder %s28, 0
      %p167 = por %p165, %p166
      %p168 = scmp.ne.s32.totalorder %s154, %s155
      %p169 = scmp.eq.s32.totalorder %s29, 3
      %p170 = por %p168, %p169
      %p172 = scmp.ne.s32.totalorder %s155, %s171
      %p173 = scmp.eq.s32.totalorder %s29, 0
      %p174 = por %p172, %p173
      %p175 = scmp.le.s32.totalorder 1, %s23
      %p176 = scmp.lt.s32.totalorder %s23, 5
      %p177 = pnand %p175, %p176
      %p178 = pneg %p177
      // Predicated region
      $region9: #{linear_head.2} parent=5 // pred_check
        _
      $region10: #{linear_head.2} parent=5 // pred_check_branch
        %180 = sbr.rel (%p177) target = $region12
      $region11: #{linear_head.2} parent=5 // pred_region
        %s181 = ssub.s32 %s23, 1
      $region12: #{linear_head.2} parent=5 // pred_fallthru
        _
      %p182 = scmp.lt.s32.totalorder %s23, 4
      // Predicated region
      $region13: #{linear_head.2} parent=5 // pred_check
        %p183 = pneg %p182
      $region14: #{linear_head.2} parent=5 // pred_check_branch
        %185 = sbr.rel (%p183) target = $region16
      $region15: #{linear_head.2} parent=5 // pred_region
        // Predicated region
        $region17: #{linear_head.2} parent=15 // pred_check
          %p186 = pneg %p55
        $region18: #{linear_head.2} parent=15 // pred_check_branch
          %188 = sbr.rel (%p186) target = $region20
        $region19: #{linear_head.2} parent=15 // pred_region
          %s189 = sand.u32 %s45, 1
          %s190 = scalar_lea.sflag [#allocation5], %s189
          %s191 = sand.u32 %s45, 1
          %s192 = smul.addr %s191, 4
          %s193 = scalar_lea.vmem [#allocation4], %s192
          %s195 = ssub.s32 64, 64
          %196 = vsyncadd %s190, %s195
          %s197 = smul.addr %s30, 64
          %s198 = scalar_lea.hbm %s0, %s197
          %s200 = sshll.u32 %s193, 4
          %s201 = int_to_ptr.vmem [resolvable:$true] %s200
          %203 = dma.hbm_to_vmem [thread:$0]  %s198, 64, %s201, %s190
        $region20: #{linear_head.2} parent=15 // pred_fallthru
          _
        // Predicated region
        $region21: #{linear_head.2} parent=15 // pred_check
          %p204 = pneg %p81
        $region22: #{linear_head.2} parent=15 // pred_check_branch
          %206 = sbr.rel (%p204) target = $region24
        $region23: #{linear_head.2} parent=15 // pred_region
          %s207 = sand.u32 %s23, 1
          %s208 = scalar_lea.sflag [#allocation8], %s207
          %s209 = sand.u32 %s71, 1
          %s210 = smul.addr %s209, 16
          %s211 = scalar_lea.vmem [#allocation7], %s210
          %s213 = ssub.s32 256, 256
          %214 = vsyncadd %s208, %s213
          %s215 = smul.addr %s31, 64
          %s216 = scalar_lea.hbm %s1, %s215
          %s217 = sshll.u32 %s211, 4
          %s218 = int_to_ptr.vmem [resolvable:$true] %s217
          %223 = dma.hbm_to_vmem [thread:$0]  %s216, 256, %s218, %s208, 128, 64, 4
        $region24: #{linear_head.2} parent=15 // pred_fallthru
          _
        // Predicated region
        $region25: #{linear_head.2} parent=15 // pred_check
          %p224 = pneg %p107
        $region26: #{linear_head.2} parent=15 // pred_check_branch
          %226 = sbr.rel (%p224) target = $region28
        $region27: #{linear_head.2} parent=15 // pred_region
          %s227 = sand.u32 %s23, 1
          %s228 = scalar_lea.sflag [#allocation8], %s227
          %s229 = sand.u32 %s97, 1
          %s230 = scalar_lea.vmem [#allocation9], %s229
          %s232 = ssub.s32 16, 16
          %233 = vsyncadd %s228, %s232
          %s234 = smul.addr %s31, 16
          %s235 = scalar_lea.hbm %s2, %s234
          %s237 = sshll.u32 %s230, 4
          %s238 = int_to_ptr.vmem [resolvable:$true] %s237
          %240 = dma.hbm_to_vmem [thread:$0]  %s235, 16, %s238, %s228
        $region28: #{linear_head.2} parent=15 // pred_fallthru
          _
      $region16: #{linear_head.2} parent=5 // pred_fallthru
        _
      %p241 = scmp.le.s32.totalorder 1, %s23
      %p242 = scmp.lt.s32.totalorder %s23, 5
      %p243 = pnand %p241, %p242
      %p244 = pneg %p243
      // Predicated region
      $region29: #{linear_head.2} parent=5 // pred_check
        _
      $region30: #{linear_head.2} parent=5 // pred_check_branch
        %246 = sbr.rel (%p243) target = $region32
      $region31: #{linear_head.2} parent=5 // pred_region
        %s247 = ssub.s32 %s23, 1
        %s248 = sand.u32 %s48, 1
        %s249 = scalar_lea.sflag [#allocation5], %s248
        %s250 = sand.u32 %s48, 1
        %s251 = smul.addr %s250, 4
        %s252 = scalar_lea.vmem [#allocation4], %s251
        // Predicated region
        $region33: #{linear_head.2} parent=31 // pred_check
          %p253 = pneg %p61
        $region34: #{linear_head.2} parent=31 // pred_check_branch
          %255 = sbr.rel (%p253) target = $region36
        $region35: #{linear_head.2} parent=31 // pred_region
          %256 = dma.done %s249, 64
        $region36: #{linear_head.2} parent=31 // pred_fallthru
          _
        %s257 = sand.u32 %s28, 1
        %s258 = scalar_lea.sflag [#allocation8], %s257
        %s259 = sand.u32 %s74, 1
        %s260 = smul.addr %s259, 16
        %s261 = scalar_lea.vmem [#allocation7], %s260
        // Predicated region
        $region37: #{linear_head.2} parent=31 // pred_check
          %p262 = pneg %p87
        $region38: #{linear_head.2} parent=31 // pred_check_branch
          %264 = sbr.rel (%p262) target = $region40
        $region39: #{linear_head.2} parent=31 // pred_region
          %265 = dma.done %s258, 256
        $region40: #{linear_head.2} parent=31 // pred_fallthru
          _
        %s266 = sand.u32 %s28, 1
        %s267 = scalar_lea.sflag [#allocation8], %s266
        %s268 = sand.u32 %s100, 1
        %s269 = scalar_lea.vmem [#allocation9], %s268
        // Predicated region
        $region41: #{linear_head.2} parent=31 // pred_check
          %p270 = pneg %p113
        $region42: #{linear_head.2} parent=31 // pred_check_branch
          %272 = sbr.rel (%p270) target = $region44
        $region43: #{linear_head.2} parent=31 // pred_region
          %273 = dma.done %s267, 16
        $region44: #{linear_head.2} parent=31 // pred_fallthru
          _
        %s274 = sand.u32 %s48, 1
        %s275 = scalar_lea.sflag [#allocation5], %s274
        %s276 = sand.u32 %s48, 1
        %s277 = smul.addr %s276, 4
        %s278 = scalar_lea.vmem [#allocation4], %s277
        %p279 = pneg %p61
        %p280 = pneg %p58
        %s281 = sand.u32 %s28, 1
        %s282 = scalar_lea.sflag [#allocation8], %s281
        %s283 = sand.u32 %s74, 1
        %s284 = smul.addr %s283, 16
        %s285 = scalar_lea.vmem [#allocation7], %s284
        %p286 = pneg %p87
        %p287 = pneg %p84
        %s288 = sand.u32 %s28, 1
        %s289 = scalar_lea.sflag [#allocation8], %s288
        %s290 = sand.u32 %s100, 1
        %s291 = scalar_lea.vmem [#allocation9], %s290
        %p292 = pneg %p113
        %p293 = pneg %p110
        %p294 = pneg %p141
        %p295 = pneg %p138
        %s296 = sand.u32 %s128, 1
        %s297 = scalar_lea.sflag [#allocation6], %s296
        %s298 = sand.u32 %s128, 1
        %s299 = smul.addr %s298, 8
        %s300 = scalar_lea.vmem [#allocation10], %s299
        %p301 = pneg %p167
        %p302 = pneg %p164
        %s303 = sand.u32 %s154, 1
        %s304 = scalar_lea.sflag [#allocation12], %s303
        %s305 = sand.u32 %s154, 1
        %s306 = smul.addr %s305, 8
        %s307 = scalar_lea.vmem [#allocation11], %s306
        %p309 = scmp.eq.s32.totalorder %s33, 0
        // Predicated region
        $region45: #{linear_head.2} parent=31 // pred_check
          %p310 = pneg %p309
        $region46: #{linear_head.2} parent=31 // pred_check_branch
          %312 = sbr.rel (%p310) target = $region48
        $region47: #{linear_head.2} parent=31 // pred_region
          %vm313 = vcmask 7168
          %314 = vst.msk [vmem:[#allocation2] sm:$0xff] %vm313, -inf
          %315 = vst.msk [vmem:[#allocation3] sm:$0xff] %vm313, 0.0
        $region48: #{linear_head.2} parent=31 // pred_fallthru
          _
        %v316 = vld [vmem:[%s252] sm:$0xf]
        %v317 = vld [vmem:[%s261] sm:$0xf]
        %v318 = vld [vmem:[%s261 + $0x4] sm:$0xf]
        %v319 = vld [vmem:[%s261 + $0x8] sm:$0xf]
        %v320 = vld [vmem:[%s261 + $0xc] sm:$0xf]
        %v321 = vld [vmem:[%s269] sm:$0x1]
        %v323 = vlaneseq
        %v324 = vshrl.u32 %v323, 7
        %v325 = vsub.s32 0, %v324
        %v326 = vrot.slane %v321, %v325
        %v332 = vunpack.c.l.b16 %v317
        %v333 = vunpack.c.l.b16 %v318
        %v334 = vunpack.c.l.b16 %v319
        %v335 = vunpack.c.l.b16 %v320
        %v336 = vpack.c.b16 %v333, %v332
        %v337 = vpack.c.b16 %v335, %v334
        %vm340 = vcmask 261120
        %v342 = vsel %vm340, %v316, 0
        %344 = vmatprep.subr.bf16.mxu0 0
        %345 = vmatpush1.bf16.msra.mxu0 %v336
        %346 = vmatprep.subr.bf16.mxu0 0
        %347 = vmatpush1.bf16.msra.mxu0 %v337
        %348 = vmatprep.subr.bf16.mxu0 0
        %349 = vmatpush1.bf16.msra.mxu0 0
        %350 = vmatprep.subr.bf16.mxu0 0
        %351 = vmatpush1.bf16.msra.mxu0 0
        %352 = vmatprep.subr.bf16.mxu0 0
        %353 = vmatpush1.bf16.msra.mxu0 0
        %354 = vmatprep.subr.bf16.mxu0 0
        %355 = vmatpush1.bf16.msra.mxu0 0
        %356 = vmatprep.subr.bf16.mxu0 0
        %357 = vmatpush1.bf16.msra.mxu0 0
        %358 = vmatprep.subr.bf16.mxu0 0
        %359 = vmatpush1.bf16.msra.mxu0 0
        %360 = vmatprep.subr.bf16.mxu0 0
        %361 = vmatpush1.bf16.msra.mxu0 0
        %362 = vmatprep.subr.bf16.mxu0 0
        %363 = vmatpush1.bf16.msra.mxu0 0
        %364 = vmatprep.subr.bf16.mxu0 0
        %365 = vmatpush1.bf16.msra.mxu0 0
        %366 = vmatprep.subr.bf16.mxu0 0
        %367 = vmatpush1.bf16.msra.mxu0 0
        %368 = vmatprep.subr.bf16.mxu0 0
        %369 = vmatpush1.bf16.msra.mxu0 0
        %370 = vmatprep.subr.bf16.mxu0 0
        %371 = vmatpush1.bf16.msra.mxu0 0
        %372 = vmatprep.subr.bf16.mxu0 0
        %373 = vmatpush1.bf16.msra.mxu0 0
        %374 = vmatprep.subr.bf16.mxu0 0
        %375 = vmatpush1.bf16.msra.mxu0 0
        %376 = vmatprep.mubr.bf16.mxu0 0
        %377 = vmatmul.mubr.bf16.gmra.mrb[0].mxu0 %v342
        %v378 = vpop.f32.mrb[0].mxu0
        %v379 = vadd.f32 %v326, %v378
        %v380 = vpop.f32.mrb[0].mxu0
        %v381 = vpop.f32.mrb[0].mxu0
        %v382 = vpop.f32.mrb[0].mxu0
        %383 = vdwg.mxu0
        %s384 = smul.u32 %s33, 128
        %v385 = vlaneseq
        %v386 = vand.u32 %v385, 127
        %v387 = vstv %s384
        %v388 = vadd.s32 %v387, %v386
        %vm389 = vcmp.lt.s32.totalorder %v388, 200
        %v390 = vsel %vm389, %v379, -1e+30
        %v391 = vld [vmem:[#allocation2] sm:$0xff]
        %392 = vmax.xlane.f32.xlu0 %v390
        %v393 = vpop.xlane.xlu0 %392
        %v394 = vmax.f32 %v391, %v393
        %v395 = vld [vmem:[#allocation3] sm:$0xff]
        %v396 = vsub.f32 %v391, %v394
        %v397 = vmul.f32 %v396, 1.442695
        %v398 = vpow.pop %v397
        %v399 = vmul.f32 %v395, %v398
        %401 = vset.pattern.permute.xlu0 0
        %402 = vperm.xlu0 %401, %v394
        %v403 = vpop.permute.xlu0 %402
        %v405 = vsub.f32 %v390, %v403
        %v406 = vmul.f32 %v405, 1.442695
        %v407 = vpow.pop %v406
        %408 = vadd.xlane.f32.xlu0 %v407
        %v409 = vpop.xlane.xlu0 %408
        %v410 = vadd.f32 %v399, %v409
        %vm411 = vcmask 7168
        %412 = vst.msk [vmem:[#allocation3] sm:$0xff] %vm411, %v410
        %413 = vst.msk [vmem:[#allocation2] sm:$0xff] %vm411, %v394
        %414 = vst [vmem:[%s300] sm:$0xff] %v390
        %p415 = scmp.eq.s32.totalorder %s33, 1
        // Predicated region
        $region49: #{linear_head.2} parent=31 // pred_check
          %p416 = pneg %p415
        $region50: #{linear_head.2} parent=31 // pred_check_branch
          %418 = sbr.rel (%p416) target = $region52
        $region51: #{linear_head.2} parent=31 // pred_region
          %v419 = vld [vmem:[#allocation2] sm:$0xff]
          %v420 = vld [vmem:[#allocation3] sm:$0xff]
          %v421 = vlog2.pop %v420
          %v422 = vmul.f32 %v421, 0.6931472
          %v423 = vadd.f32 %v419, %v422
          %424 = vst.msk [vmem:[%s307] sm:$0xff] %vm411, %v423
        $region52: #{linear_head.2} parent=31 // pred_fallthru
          _
        %s425 = sand.u32 %s128, 1
        %s426 = scalar_lea.sflag [#allocation6], %s425
        %s427 = sand.u32 %s128, 1
        %s428 = smul.addr %s427, 8
        %s429 = scalar_lea.vmem [#allocation10], %s428
        %s430 = sand.u32 %s154, 1
        %s431 = scalar_lea.sflag [#allocation12], %s430
        %s432 = sand.u32 %s154, 1
        %s433 = smul.addr %s432, 8
        %s434 = scalar_lea.vmem [#allocation11], %s433
        // Predicated region
        $region53: #{linear_head.2} parent=31 // pred_check
          %p435 = pneg %p138
        $region54: #{linear_head.2} parent=31 // pred_check_branch
          %437 = sbr.rel (%p435) target = $region56
        $region55: #{linear_head.2} parent=31 // pred_region
          %s439 = ssub.s32 128, 128
          %440 = vsyncadd %s426, %s439
          %s441 = smul.addr %s32, 2
          %s442 = sadd.s32 %s33, %s441
          %s443 = smul.addr %s442, 128
          %s444 = scalar_lea.hbm %s3, %s443
          %s446 = sshll.u32 %s429, 4
          %s447 = int_to_ptr.vmem [resolvable:$true] %s446
          %449 = dma.vmem_to_hbm [thread:$0]  %s447, 128, %s444, %s426
        $region56: #{linear_head.2} parent=31 // pred_fallthru
          _
        // Predicated region
        $region57: #{linear_head.2} parent=31 // pred_check
          %p450 = pneg %p164
        $region58: #{linear_head.2} parent=31 // pred_check_branch
          %452 = sbr.rel (%p450) target = $region60
        $region59: #{linear_head.2} parent=31 // pred_region
          %s454 = ssub.s32 128, 128
          %455 = vsyncadd %s431, %s454
          %s456 = smul.addr %s32, 128
          %s457 = scalar_lea.hbm %s4, %s456
          %s459 = sshll.u32 %s434, 4
          %s460 = int_to_ptr.vmem [resolvable:$true] %s459
          %462 = dma.vmem_to_hbm [thread:$0]  %s460, 128, %s457, %s431
        $region60: #{linear_head.2} parent=31 // pred_fallthru
          _
      $region32: #{linear_head.2} parent=5 // pred_fallthru
        _
      %p463 = scmp.le.s32.totalorder 2, %s23
      // Predicated region
      $region61: #{linear_head.2} parent=5 // pred_check
        %p464 = pneg %p463
      $region62: #{linear_head.2} parent=5 // pred_check_branch
        %466 = sbr.rel (%p464) target = $region64
      $region63: #{linear_head.2} parent=5 // pred_region
        %s467 = ssub.s32 %s23, 2
        // Predicated region
        $region65: #{linear_head.2} parent=63 // pred_check
          %p468 = pneg %p144
        $region66: #{linear_head.2} parent=63 // pred_check_branch
          %470 = sbr.rel (%p468) target = $region68
        $region67: #{linear_head.2} parent=63 // pred_region
          %s471 = sand.u32 %s129, 1
          %s472 = scalar_lea.sflag [#allocation6], %s471
          %s473 = sand.u32 %s129, 1
          %s474 = smul.addr %s473, 8
          %s475 = scalar_lea.vmem [#allocation10], %s474
          %476 = dma.done %s472, 128
        $region68: #{linear_head.2} parent=63 // pred_fallthru
          _
        // Predicated region
        $region69: #{linear_head.2} parent=63 // pred_check
          %p477 = pneg %p170
        $region70: #{linear_head.2} parent=63 // pred_check_branch
          %479 = sbr.rel (%p477) target = $region72
        $region71: #{linear_head.2} parent=63 // pred_region
          %s480 = sand.u32 %s155, 1
          %s481 = scalar_lea.sflag [#allocation12], %s480
          %s482 = sand.u32 %s155, 1
          %s483 = smul.addr %s482, 8
          %s484 = scalar_lea.vmem [#allocation11], %s483
          %485 = dma.done %s481, 128
        $region72: #{linear_head.2} parent=63 // pred_fallthru
          _
      $region64: #{linear_head.2} parent=5 // pred_fallthru
        _
    $region6: #{linear_head.2} parent=1 // loop_footer
      %s27 = sadd.s32 1, %s23
    $region7: #{linear_head.2} parent=1 // loop_footer_branch
      %22 = sbr.rel target = $region3
    $region8: #{linear_head.2} parent=1 // loop_exit
      _
    %486 = vsyncpa [#allocation5], 1
    %s487 = scalar_lea.sflag [#allocation5], 1
    %488 = vsyncpa %s487, 1
    %489 = vsyncpa [#allocation8], 1
    %s490 = scalar_lea.sflag [#allocation8], 1
    %491 = vsyncpa %s490, 1
    %492 = vsyncpa [#allocation6], 1
    %s493 = scalar_lea.sflag [#allocation6], 1
    %494 = vsyncpa %s493, 1
    %495 = vsyncpa [#allocation12], 1
    %s496 = scalar_lea.sflag [#allocation12], 1
    %497 = vsyncpa %s496, 1

</llo_original>
